<compile_context>
chip_gen: v6e
topology: v6e:2x2x1
jax: 0.10.0
libtpu: 0.0.40
codegen_flags: <defaults>
</compile_context>

<pallas_src>
import jax
import jax.numpy as jnp
from jax.experimental import pallas as pl
from jax.experimental.pallas import tpu as pltpu

HIDDEN_SIZE = 50
INPUT_SIZE = 1
SEQUENCE_LENGTH = 25
LANE = 128  # pad hidden dim to a full lane width for dense vst / full MXU tiles


def _round_up(n, m):
    return ((n + m - 1) // m) * m


def _odefunc_kernel(idx_ref, x_ref, h_ref, w1h_ref, w1x_ref, b1_ref,
                    w2_ref, b2_ref, out_ref):
    # idx_ref : SMEM (1,) int32 -- consumed by the index_map (x_t gather only)
    # x_ref   : (1, B, I)  time-step slice of inputs selected by idx
    # h_ref   : (B, H)
    # w1h_ref : (H, Hp)    w1x_ref : (I, Hp)    b1_ref : (1, Hp)
    # w2_ref  : (Hp, Hp)   b2_ref  : (1, Hp)    out_ref: (B, Hp)
    del idx_ref
    h = h_ref[...]
    x_t = x_ref[0]                                           # (B, I)

    z1 = jnp.dot(h, w1h_ref[...], preferred_element_type=jnp.float32)
    if x_ref.shape[-1] == 1:
        # input_size == 1: rank-1 broadcast multiply on the VPU, no K=1 matmul.
        z1 = z1 + x_t * w1x_ref[...]
    else:
        z1 = z1 + jnp.dot(x_t, w1x_ref[...],
                          preferred_element_type=jnp.float32)
    a1 = jnp.tanh(z1 + b1_ref[...])
    z2 = jnp.dot(a1, w2_ref[...],
                 preferred_element_type=jnp.float32) + b2_ref[...]
    out_ref[...] = z2.astype(out_ref.dtype)


@jax.jit
def odefunc_forward(t, h, inputs, w1h_p, w1x_p, b1_p, w2_p, b2_p):
    """One fully-jitted Neural-ODE RHS eval: Lin2(tanh(Lin1([h, x_t])))."""
    B, H = h.shape
    S, I = inputs.shape[1], inputs.shape[2]
    Hp = w2_p.shape[0]

    # Traced time index (no device->host sync). .astype(int32) truncates toward
    # zero, matching Python int(); clip keeps the dynamic gather in range.
    t = jnp.asarray(t, jnp.float32)
    idx = jnp.clip((t * (S - 1)).astype(jnp.int32), 0, S - 1).reshape((1,))

    # (S, B, I) layout so the dynamic time gather is a leading-axis block pick.
    inputs_t = jnp.transpose(inputs, (1, 0, 2))

    flops = 2 * B * (H * Hp + I * Hp + Hp * Hp)
    bytes_accessed = 4 * (B * I + B * H + H * Hp + I * Hp + Hp
                          + Hp * Hp + Hp + B * Hp)

    out_padded = pl.pallas_call(
        _odefunc_kernel,
        out_shape=jax.ShapeDtypeStruct((B, Hp), jnp.float32),
        grid_spec=pltpu.PrefetchScalarGridSpec(
            num_scalar_prefetch=1,
            grid=(1,),
            in_specs=[
                # x_t gather: block index along S comes from the prefetched idx.
                pl.BlockSpec((1, B, I), lambda i, s: (s[0], 0, 0)),
                pl.BlockSpec((B, H),    lambda i, s: (0, 0)),
                pl.BlockSpec((H, Hp),   lambda i, s: (0, 0)),
                pl.BlockSpec((I, Hp),   lambda i, s: (0, 0)),
                pl.BlockSpec((1, Hp),   lambda i, s: (0, 0)),
                pl.BlockSpec((Hp, Hp),  lambda i, s: (0, 0)),
                pl.BlockSpec((1, Hp),   lambda i, s: (0, 0)),
            ],
            out_specs=pl.BlockSpec((B, Hp), lambda i, s: (0, 0)),
        ),
        compiler_params=pltpu.CompilerParams(
            dimension_semantics=("arbitrary",)),
        cost_estimate=pl.CostEstimate(
            flops=flops, transcendentals=B * Hp,
            bytes_accessed=bytes_accessed),
    )(idx, inputs_t, h, w1h_p, w1x_p, b1_p, w2_p, b2_p)

    # Padded lanes are exactly zero (zero-padded weights/biases); slice them off.
    return out_padded[:, :H]


class ODEFuncPallas:
    """JAX/Pallas mirror of the PyTorch ODEFunc module."""

    def __init__(self, hidden_size, input_size, key):
        k1, k2, k3, k4 = jax.random.split(key, 4)
        fan1 = hidden_size + input_size
        fan2 = hidden_size
        bound1 = 1.0 / (fan1 ** 0.5)
        bound2 = 1.0 / (fan2 ** 0.5)
        self.hidden_size = hidden_size
        self.input_size = input_size

        # Logical weights, stored (in, out) so y = x @ W + b (== PyTorch x @ W.T + b).
        self.w1 = jax.random.uniform(
            k1, (fan1, hidden_size), jnp.float32, -bound1, bound1)
        self.b1 = jax.random.uniform(
            k2, (hidden_size,), jnp.float32, -bound1, bound1)
        self.w2 = jax.random.uniform(
            k3, (hidden_size, hidden_size), jnp.float32, -bound2, bound2)
        self.b2 = jax.random.uniform(
            k4, (hidden_size,), jnp.float32, -bound2, bound2)

        # Lane-dense padded copies (hidden -> Hp lanes), padded with zeros once
        # at init so the padded output lanes are exactly zero.
        H, I = hidden_size, input_size
        Hp = max(LANE, _round_up(hidden_size, LANE))
        self.w1h_p = jnp.zeros((H, Hp), jnp.float32).at[:, :H].set(self.w1[:H, :])
        self.w1x_p = jnp.zeros((I, Hp), jnp.float32).at[:, :H].set(self.w1[H:, :])
        self.b1_p = jnp.zeros((1, Hp), jnp.float32).at[0, :H].set(self.b1)
        self.w2_p = jnp.zeros((Hp, Hp), jnp.float32).at[:H, :H].set(self.w2)
        self.b2_p = jnp.zeros((1, Hp), jnp.float32).at[0, :H].set(self.b2)

        self.inputs = None  # (B, sequence_length, input_size)

    def __call__(self, t, h):
        # t may be a Python float OR a traced/device scalar (works inside jit,
        # vmap, or an adaptive ODE solver) -- no host sync.
        return odefunc_forward(t, h, self.inputs, self.w1h_p, self.w1x_p,
                               self.b1_p, self.w2_p, self.b2_p)


if __name__ == "__main__":
    key = jax.random.PRNGKey(0)
    k_params, k_h, k_in = jax.random.split(key, 3)

    B = 2
    func = ODEFuncPallas(HIDDEN_SIZE, INPUT_SIZE, k_params)
    func.inputs = jax.random.normal(
        k_in, (B, SEQUENCE_LENGTH, INPUT_SIZE), jnp.float32)

    h = jax.random.normal(k_h, (B, HIDDEN_SIZE), jnp.float32)
    t = 0.3

    out = func(t, h)
    out = jax.block_until_ready(out)

    # Pure-JAX reference of the original module math.
    idx = min(int(t * (SEQUENCE_LENGTH - 1)), SEQUENCE_LENGTH - 1)
    hx = jnp.concatenate([h, func.inputs[:, idx, :]], axis=1)
    ref = jnp.tanh(hx @ func.w1 + func.b1) @ func.w2 + func.b2
    assert out.shape == (B, HIDDEN_SIZE)
    assert jnp.allclose(out, ref, atol=1e-5, rtol=1e-5)

    # Also exercise a device-scalar t (traced index path, no host sync).
    out_traced = jax.block_until_ready(func(jnp.float32(t), h))
    assert jnp.allclose(out_traced, ref, atol=1e-5, rtol=1e-5)

    print("KERNEL_OK")
</pallas_src>

<mosaic_0001>
module attributes {stable_mosaic.version = 11 : i64} {
  func.func @_odefunc_kernel(%arg0: i32, %arg1: memref<1xi32, #tpu.memory_space<smem>>, %arg2: memref<1x2x1xf32, #tpu.memory_space<vmem>>, %arg3: memref<2x50xf32, #tpu.memory_space<vmem>>, %arg4: memref<50x128xf32, #tpu.memory_space<vmem>>, %arg5: memref<1x128xf32, #tpu.memory_space<vmem>>, %arg6: memref<1x128xf32, #tpu.memory_space<vmem>>, %arg7: memref<128x128xf32, #tpu.memory_space<vmem>>, %arg8: memref<1x128xf32, #tpu.memory_space<vmem>>, %arg9: memref<2x128xf32, #tpu.memory_space<vmem>>) attributes {dimension_semantics = [#tpu.dimension_semantics<arbitrary>], iteration_bounds = array<i64: 1>, scalar_prefetch = 1 : i64, scratch_operands = 0 : i64, tpu.core_type = #tpu.core_type<tc>, window_params = [{transform_indices = @transform_0, window_bounds = array<i64: 1, 2, 1>}, {pipeline_mode = #tpu.pipeline_mode<synchronous>, transform_indices = @transform_1, window_bounds = array<i64: 2, 50>}, {pipeline_mode = #tpu.pipeline_mode<synchronous>, transform_indices = @transform_2, window_bounds = array<i64: 50, 128>}, {pipeline_mode = #tpu.pipeline_mode<synchronous>, transform_indices = @transform_3, window_bounds = array<i64: 1, 128>}, {pipeline_mode = #tpu.pipeline_mode<synchronous>, transform_indices = @transform_4, window_bounds = array<i64: 1, 128>}, {pipeline_mode = #tpu.pipeline_mode<synchronous>, transform_indices = @transform_5, window_bounds = array<i64: 128, 128>}, {pipeline_mode = #tpu.pipeline_mode<synchronous>, transform_indices = @transform_6, window_bounds = array<i64: 1, 128>}, {pipeline_mode = #tpu.pipeline_mode<synchronous>, transform_indices = @transform_7, window_bounds = array<i64: 2, 128>}]} {
    %c0 = arith.constant 0 : index
    %c0_0 = arith.constant 0 : index
    %0 = vector.load %arg3[%c0, %c0_0] : memref<2x50xf32, #tpu.memory_space<vmem>>, vector<2x50xf32>
    %c0_1 = arith.constant 0 : index
    %c0_2 = arith.constant 0 : index
    %c0_3 = arith.constant 0 : index
    %1 = vector.load %arg2[%c0_1, %c0_2, %c0_3] : memref<1x2x1xf32, #tpu.memory_space<vmem>>, vector<1x2x1xf32>
    %2 = vector.shape_cast %1 : vector<1x2x1xf32> to vector<2x1xf32>
    %c0_4 = arith.constant 0 : index
    %c0_5 = arith.constant 0 : index
    %3 = vector.load %arg4[%c0_4, %c0_5] : memref<50x128xf32, #tpu.memory_space<vmem>>, vector<50x128xf32>
    %cst = arith.constant dense<0.000000e+00> : vector<2x128xf32>
    %4 = tpu.matmul %0, %3, %cst {dimension_numbers = #tpu.dot_dimension_numbers<[1], [0], [0], [1], [0, 0, 1, 1], [], []>} : vector<2x50xf32>, vector<50x128xf32>, vector<2x128xf32> -> vector<2x128xf32>
    %c0_6 = arith.constant 0 : index
    %c0_7 = arith.constant 0 : index
    %5 = vector.load %arg5[%c0_6, %c0_7] : memref<1x128xf32, #tpu.memory_space<vmem>>, vector<1x128xf32>
    %6 = vector.broadcast %2 : vector<2x1xf32> to vector<2x128xf32>
    %7 = vector.broadcast %5 : vector<1x128xf32> to vector<2x128xf32>
    %8 = arith.mulf %6, %7 : vector<2x128xf32>
    %9 = arith.addf %4, %8 : vector<2x128xf32>
    %c0_8 = arith.constant 0 : index
    %c0_9 = arith.constant 0 : index
    %10 = vector.load %arg6[%c0_8, %c0_9] : memref<1x128xf32, #tpu.memory_space<vmem>>, vector<1x128xf32>
    %11 = vector.broadcast %10 : vector<1x128xf32> to vector<2x128xf32>
    %12 = arith.addf %9, %11 : vector<2x128xf32>
    %13 = math.tanh %12 : vector<2x128xf32>
    %c0_10 = arith.constant 0 : index
    %c0_11 = arith.constant 0 : index
    %14 = vector.load %arg7[%c0_10, %c0_11] : memref<128x128xf32, #tpu.memory_space<vmem>>, vector<128x128xf32>
    %cst_12 = arith.constant dense<0.000000e+00> : vector<2x128xf32>
    %15 = tpu.matmul %13, %14, %cst_12 {dimension_numbers = #tpu.dot_dimension_numbers<[1], [0], [0], [1], [0, 0, 1, 1], [], []>} : vector<2x128xf32>, vector<128x128xf32>, vector<2x128xf32> -> vector<2x128xf32>
    %c0_13 = arith.constant 0 : index
    %c0_14 = arith.constant 0 : index
    %16 = vector.load %arg8[%c0_13, %c0_14] : memref<1x128xf32, #tpu.memory_space<vmem>>, vector<1x128xf32>
    %17 = vector.broadcast %16 : vector<1x128xf32> to vector<2x128xf32>
    %18 = arith.addf %15, %17 : vector<2x128xf32>
    %c0_15 = arith.constant 0 : index
    %c0_16 = arith.constant 0 : index
    %19 = vector.load %arg9[%c0_15, %c0_16] : memref<2x128xf32, #tpu.memory_space<vmem>>, vector<2x128xf32>
    tpu.vector_store %arg9[%c0_15, %c0_16], %18 {strides = array<i32>} : memref<2x128xf32, #tpu.memory_space<vmem>>, vector<2x128xf32>,
    return
  }
  func.func @transform_0(%arg0: i32, %arg1: memref<1xi32, #tpu.memory_space<smem>>) -> (i32, i32, i32) {
    %c0 = arith.constant 0 : index
    %0 = memref.load %arg1[%c0] : memref<1xi32, #tpu.memory_space<smem>>
    %c0_i32 = arith.constant 0 : i32
    %c0_i32_0 = arith.constant 0 : i32
    %c0_i32_1 = arith.constant 0 : i32
    return %0, %c0_i32, %c0_i32_0 : i32, i32, i32
  }
  func.func @transform_1(%arg0: i32, %arg1: memref<1xi32, #tpu.memory_space<smem>>) -> (i32, i32) {
    %c0_i32 = arith.constant 0 : i32
    %c0_i32_0 = arith.constant 0 : i32
    %c0_i32_1 = arith.constant 0 : i32
    return %c0_i32, %c0_i32_0 : i32, i32
  }
  func.func @transform_2(%arg0: i32, %arg1: memref<1xi32, #tpu.memory_space<smem>>) -> (i32, i32) {
    %c0_i32 = arith.constant 0 : i32
    %c0_i32_0 = arith.constant 0 : i32
    %c0_i32_1 = arith.constant 0 : i32
    return %c0_i32, %c0_i32_0 : i32, i32
  }
  func.func @transform_3(%arg0: i32, %arg1: memref<1xi32, #tpu.memory_space<smem>>) -> (i32, i32) {
    %c0_i32 = arith.constant 0 : i32
    %c0_i32_0 = arith.constant 0 : i32
    %c0_i32_1 = arith.constant 0 : i32
    return %c0_i32, %c0_i32_0 : i32, i32
  }
  func.func @transform_4(%arg0: i32, %arg1: memref<1xi32, #tpu.memory_space<smem>>) -> (i32, i32) {
    %c0_i32 = arith.constant 0 : i32
    %c0_i32_0 = arith.constant 0 : i32
    %c0_i32_1 = arith.constant 0 : i32
    return %c0_i32, %c0_i32_0 : i32, i32
  }
  func.func @transform_5(%arg0: i32, %arg1: memref<1xi32, #tpu.memory_space<smem>>) -> (i32, i32) {
    %c0_i32 = arith.constant 0 : i32
    %c0_i32_0 = arith.constant 0 : i32
    %c0_i32_1 = arith.constant 0 : i32
    return %c0_i32, %c0_i32_0 : i32, i32
  }
  func.func @transform_6(%arg0: i32, %arg1: memref<1xi32, #tpu.memory_space<smem>>) -> (i32, i32) {
    %c0_i32 = arith.constant 0 : i32
    %c0_i32_0 = arith.constant 0 : i32
    %c0_i32_1 = arith.constant 0 : i32
    return %c0_i32, %c0_i32_0 : i32, i32
  }
  func.func @transform_7(%arg0: i32, %arg1: memref<1xi32, #tpu.memory_space<smem>>) -> (i32, i32) {
    %c0_i32 = arith.constant 0 : i32
    %c0_i32_0 = arith.constant 0 : i32
    %c0_i32_1 = arith.constant 0 : i32
    return %c0_i32, %c0_i32_0 : i32, i32
  }
}

</mosaic_0001>

<llo_original>
// kernel: odefunc_forward.1
$region0: #{odefunc_forward.1}
  #allocation0 [shape = 'u32[]', space=smem, size = 0x4, offset = 0x4, fixed_abs, tag = 'smem constant byte address 0x4 - core index']
  #allocation1 [shape = 'u32[144,128]{1,0:T(1,128)}', space=vmem, size = 0x12000, scoped, tag = 'internal scratch']
  #allocation2 [shape = 's32[1]{0}', space=sflag, size = 0x4, scoped, tag = 'scoped memory for odefunc_forward.1']
  #allocation3 [shape = 's32[1]{0:T(128)S(6)}', space=smem, size = 0x200, scoped, tag = 'prefetched SMEM operand 0']
  %s0 = inlined_call_operand.<no memory space> [shape: s32[1], index: 0, kind: input, shape index: {}]
  %s1 = inlined_call_operand.vmem [shape: f32[25,2,1], index: 1, kind: input, shape index: {}]
  %s2 = inlined_call_operand.vmem [shape: f32[2,50], index: 2, kind: input, shape index: {}]
  %s3 = inlined_call_operand.vmem [shape: f32[50,128], index: 3, kind: input, shape index: {}]
  %s4 = inlined_call_operand.vmem [shape: f32[1,128], index: 4, kind: input, shape index: {}]
  %s5 = inlined_call_operand.vmem [shape: f32[1,128], index: 5, kind: input, shape index: {}]
  %s6 = inlined_call_operand.hbm [shape: f32[128,128], index: 6, kind: input, shape index: {}]
  %s7 = inlined_call_operand.vmem [shape: f32[1,128], index: 7, kind: input, shape index: {}]
  %s8 = inlined_call_operand.hbm [shape: f32[2,128], index: 8, kind: output, shape index: {}]
  %s9 = sld [smem:[#allocation0]]
  $region42: #{odefunc_forward.1} parent=0
    _
  %s11 = ssub.s32 1, %s9
  %s12 = scalar_select 0, %s11, %s9
  %13 = sst [smem:[#allocation3]] %s0
  $region1: #{odefunc_forward.1} parent=0
    #allocation4 [shape = 'u8[65536]{0}', space=vmem, size = 0x10000, scoped, tag = 'input window, operand 6, single buffered']
    #allocation5 [shape = 's32[1]{0}', space=sflag, size = 0x4, scoped, tag = 'scoped memory for odefunc_forward.1']
    #allocation6 [shape = 's32[1]{0}', space=sflag, size = 0x4, scoped, tag = 'scoped memory for odefunc_forward.1']
    #allocation7 [shape = 'u8[1024]{0}', space=vmem, size = 0x400, scoped, tag = 'output window, operand 0, single buffered']
    %14 = vsyncpa [#allocation5], 0
    %15 = vsyncpa [#allocation6], 0
    // Predicated region
    $region2: #{odefunc_forward.1} parent=1 // pred_check
      _
    $region3: #{odefunc_forward.1} parent=1 // pred_check_branch
      %17 = sbr.rel (0) target = $region5
    $region4: #{odefunc_forward.1} parent=1 // pred_region
      %s18 = sld [smem:[#allocation3]]
      %p19 = scmp.lt.s32.totalorder %s18, 24
      %s20 = scalar_select %p19, %s18, 24
      %s21 = smul.addr %s20, 2
      %s22 = scalar_lea.vmem %s1, %s21
      %s23 = sld [smem:[#allocation3]]
    $region5: #{odefunc_forward.1} parent=1 // pred_fallthru
      _
    // Predicated region
    $region6: #{odefunc_forward.1} parent=1 // pred_check
      _
    $region7: #{odefunc_forward.1} parent=1 // pred_check_branch
      %25 = sbr.rel (0) target = $region9
    $region8: #{odefunc_forward.1} parent=1 // pred_region
      _
    $region9: #{odefunc_forward.1} parent=1 // pred_fallthru
      _
    // Predicated region
    $region10: #{odefunc_forward.1} parent=1 // pred_check
      _
    $region11: #{odefunc_forward.1} parent=1 // pred_check_branch
      %27 = sbr.rel (0) target = $region13
    $region12: #{odefunc_forward.1} parent=1 // pred_region
      _
    $region13: #{odefunc_forward.1} parent=1 // pred_fallthru
      _
    // Predicated region
    $region14: #{odefunc_forward.1} parent=1 // pred_check
      _
    $region15: #{odefunc_forward.1} parent=1 // pred_check_branch
      %29 = sbr.rel (0) target = $region17
    $region16: #{odefunc_forward.1} parent=1 // pred_region
      _
    $region17: #{odefunc_forward.1} parent=1 // pred_fallthru
      _
    // Predicated region
    $region18: #{odefunc_forward.1} parent=1 // pred_check
      _
    $region19: #{odefunc_forward.1} parent=1 // pred_check_branch
      %31 = sbr.rel (0) target = $region21
    $region20: #{odefunc_forward.1} parent=1 // pred_region
      _
    $region21: #{odefunc_forward.1} parent=1 // pred_fallthru
      _
    // Predicated region
    $region22: #{odefunc_forward.1} parent=1 // pred_check
      _
    $region23: #{odefunc_forward.1} parent=1 // pred_check_branch
      %33 = sbr.rel (0) target = $region25
    $region24: #{odefunc_forward.1} parent=1 // pred_region
      %s35 = ssub.s32 2048, 2048
      %36 = vsyncadd [#allocation5], %s35
      %s37 = sshll.u32 [#allocation4], 4
      %s38 = int_to_ptr.vmem [resolvable:$true] %s37
      %43 = dma.hbm_to_vmem [thread:$0]  %s6, 2048, %s38, [#allocation5], 128, 128, 8
    $region25: #{odefunc_forward.1} parent=1 // pred_fallthru
      _
    // Predicated region
    $region26: #{odefunc_forward.1} parent=1 // pred_check
      _
    $region27: #{odefunc_forward.1} parent=1 // pred_check_branch
      %45 = sbr.rel (0) target = $region29
    $region28: #{odefunc_forward.1} parent=1 // pred_region
      _
    $region29: #{odefunc_forward.1} parent=1 // pred_fallthru
      _
    // Predicated region
    $region30: #{odefunc_forward.1} parent=1 // pred_check
      _
    $region31: #{odefunc_forward.1} parent=1 // pred_check_branch
      %47 = sbr.rel (0) target = $region33
    $region32: #{odefunc_forward.1} parent=1 // pred_region
      %48 = dma.done [#allocation5], 2048
    $region33: #{odefunc_forward.1} parent=1 // pred_fallthru
      _
    %s49 = sld [smem:[#allocation3]]
    %p50 = scmp.lt.s32.totalorder %s49, 24
    %s51 = scalar_select %p50, %s49, 24
    %s52 = smul.addr %s51, 2
    %s53 = scalar_lea.vmem %s1, %s52
    %s54 = sld [smem:[#allocation3]]
    %p55 = scmp.lt.s32.totalorder %s54, 24
    %s56 = scalar_select %p55, %s54, 24
    %s57 = smul.addr %s56, 2
    %s58 = scalar_lea.vmem %s1, %s57
    %s59 = sld [smem:[#allocation3]]
    %v60 = vld [vmem:[%s2] sm:$0x3]
    %v61 = vld [vmem:[%s58] sm:$0x3]
    %v62 = vld [vmem:[%s3] sm:$0xff]
    %v63 = vld [vmem:[%s3 + $0x8] sm:$0xff]
    %v64 = vld [vmem:[%s3 + $0x10] sm:$0xff]
    %v65 = vld [vmem:[%s3 + $0x18] sm:$0xff]
    %v66 = vld [vmem:[%s3 + $0x20] sm:$0xff]
    %v67 = vld [vmem:[%s3 + $0x28] sm:$0xff]
    %v68 = vld [vmem:[%s3 + $0x30] sm:$0x3]
    %v69 = vld [vmem:[%s4] sm:$0x1]
    %71 = vset.pattern.permute.xlu0 0
    %72 = vperm.xlu0 %71, %v61
    %v73 = vpop.permute.xlu0 %72
    %v76 = vlaneseq
    %v77 = vshrl.u32 %v76, 7
    %v78 = vsub.s32 0, %v77
    %v79 = vrot.slane %v69, %v78
    %v81 = vmul.f32 %v73, %v79
    %vm82 = vcmask 408576
    %v84 = vsel %vm82, %v60, 0
    %vm86 = vcmask 1041408
    %v88 = vsel %vm86, %v68, 0
    %90 = vmatprep.subr.mxu0 0.0
    %91 = vmatpush1.msra.mxu0 0.0
    %92 = vmatprep.subr.mxu0 0.0
    %93 = vmatpush1.msra.mxu0 0.0
    %94 = vmatprep.subr.mxu0 0.0
    %95 = vmatpush1.msra.mxu0 0.0
    %96 = vmatprep.subr.mxu0 0.0
    %97 = vmatpush1.msra.mxu0 0.0
    %98 = vmatprep.subr.mxu0 0.0
    %99 = vmatpush1.msra.mxu0 0.0
    %100 = vmatprep.subr.mxu0 0.0
    %101 = vmatpush1.msra.mxu0 0.0
    %102 = vmatprep.subr.mxu0 0.0
    %103 = vmatpush1.msra.mxu0 0.0
    %104 = vmatprep.subr.mxu0 0.0
    %105 = vmatpush1.msra.mxu0 0.0
    %106 = vmatprep.subr.mxu0 0.0
    %107 = vmatpush1.msra.mxu0 0.0
    %108 = vmatprep.subr.mxu0 0.0
    %109 = vmatpush1.msra.mxu0 %v88
    %110 = vmatprep.subr.mxu0 0.0
    %111 = vmatpush1.msra.mxu0 %v67
    %112 = vmatprep.subr.mxu0 0.0
    %113 = vmatpush1.msra.mxu0 %v66
    %114 = vmatprep.subr.mxu0 0.0
    %115 = vmatpush1.msra.mxu0 %v65
    %116 = vmatprep.subr.mxu0 0.0
    %117 = vmatpush1.msra.mxu0 %v64
    %118 = vmatprep.subr.mxu0 0.0
    %119 = vmatpush1.msra.mxu0 %v63
    %120 = vmatprep.subr.mxu0 0.0
    %121 = vmatpush1.msra.mxu0 %v62
    %122 = vmatprep.subr.mxu0 0.0
    %123 = vmatpush2.msra.mxu0 0.0
    %124 = vmatprep.subr.mxu0 0.0
    %125 = vmatpush2.msra.mxu0 0.0
    %126 = vmatprep.subr.mxu0 0.0
    %127 = vmatpush2.msra.mxu0 0.0
    %128 = vmatprep.subr.mxu0 0.0
    %129 = vmatpush2.msra.mxu0 0.0
    %130 = vmatprep.subr.mxu0 0.0
    %131 = vmatpush2.msra.mxu0 0.0
    %132 = vmatprep.subr.mxu0 0.0
    %133 = vmatpush2.msra.mxu0 0.0
    %134 = vmatprep.subr.mxu0 0.0
    %135 = vmatpush2.msra.mxu0 0.0
    %136 = vmatprep.subr.mxu0 0.0
    %137 = vmatpush2.msra.mxu0 0.0
    %138 = vmatprep.subr.mxu0 0.0
    %139 = vmatpush2.msra.mxu0 0.0
    %140 = vmatprep.subr.mxu0 0.0
    %141 = vmatpush2.msra.mxu0 0.0
    %142 = vmatprep.subr.mxu0 0.0
    %143 = vmatpush2.msra.mxu0 0.0
    %144 = vmatprep.subr.mxu0 0.0
    %145 = vmatpush2.msra.mxu0 0.0
    %146 = vmatprep.subr.mxu0 0.0
    %147 = vmatpush2.msra.mxu0 0.0
    %148 = vmatprep.subr.mxu0 0.0
    %149 = vmatpush2.msra.mxu0 0.0
    %150 = vmatprep.subr.mxu0 0.0
    %151 = vmatpush2.msra.mxu0 0.0
    %152 = vmatprep.subr.mxu0 0.0
    %153 = vmatpush2.msra.mxu0 0.0
    %154 = vmatprep.mubr.f32.mxu0 0.0
    %155 = vmatmul.mubr.f32.gmra.mxu0 %v84
    %v156 = vpop.f32.mrf.mxu0
    %v157 = vadd.f32 %v81, %v156
    %v158 = vpop.f32.mrf.mxu0
    %159 = vdwg.mxu0
    %v160 = vld [vmem:[%s5] sm:$0x1]
    %v162 = vlaneseq
    %v163 = vshrl.u32 %v162, 7
    %v164 = vsub.s32 0, %v163
    %v165 = vrot.slane %v160, %v164
    %v167 = vadd.f32 %v157, %v165
    %v168 = vtanh.pop %v167
    %v169 = vld [vmem:[#allocation4] sm:$0xff]
    %v170 = vld [vmem:[#allocation4 + $0x8] sm:$0xff]
    %v171 = vld [vmem:[#allocation4 + $0x10] sm:$0xff]
    %v172 = vld [vmem:[#allocation4 + $0x18] sm:$0xff]
    %v173 = vld [vmem:[#allocation4 + $0x20] sm:$0xff]
    %v174 = vld [vmem:[#allocation4 + $0x28] sm:$0xff]
    %v175 = vld [vmem:[#allocation4 + $0x30] sm:$0xff]
    %v176 = vld [vmem:[#allocation4 + $0x38] sm:$0xff]
    %v177 = vld [vmem:[#allocation4 + $0x40] sm:$0xff]
    %v178 = vld [vmem:[#allocation4 + $0x48] sm:$0xff]
    %v179 = vld [vmem:[#allocation4 + $0x50] sm:$0xff]
    %v180 = vld [vmem:[#allocation4 + $0x58] sm:$0xff]
    %v181 = vld [vmem:[#allocation4 + $0x60] sm:$0xff]
    %v182 = vld [vmem:[#allocation4 + $0x68] sm:$0xff]
    %v183 = vld [vmem:[#allocation4 + $0x70] sm:$0xff]
    %v184 = vld [vmem:[#allocation4 + $0x78] sm:$0xff]
    %v185 = vld [vmem:[%s7] sm:$0x1]
    %v187 = vlaneseq
    %v188 = vshrl.u32 %v187, 7
    %v189 = vsub.s32 0, %v188
    %v190 = vrot.slane %v185, %v189
    %192 = vmatprep.subr.mxu0 0.0
    %193 = vmatpush1.msra.mxu0 %v184
    %194 = vmatprep.subr.mxu0 0.0
    %195 = vmatpush1.msra.mxu0 %v183
    %196 = vmatprep.subr.mxu0 0.0
    %197 = vmatpush1.msra.mxu0 %v182
    %198 = vmatprep.subr.mxu0 0.0
    %199 = vmatpush1.msra.mxu0 %v181
    %200 = vmatprep.subr.mxu0 0.0
    %201 = vmatpush1.msra.mxu0 %v180
    %202 = vmatprep.subr.mxu0 0.0
    %203 = vmatpush1.msra.mxu0 %v179
    %204 = vmatprep.subr.mxu0 0.0
    %205 = vmatpush1.msra.mxu0 %v178
    %206 = vmatprep.subr.mxu0 0.0
    %207 = vmatpush1.msra.mxu0 %v177
    %208 = vmatprep.subr.mxu0 0.0
    %209 = vmatpush1.msra.mxu0 %v176
    %210 = vmatprep.subr.mxu0 0.0
    %211 = vmatpush1.msra.mxu0 %v175
    %212 = vmatprep.subr.mxu0 0.0
    %213 = vmatpush1.msra.mxu0 %v174
    %214 = vmatprep.subr.mxu0 0.0
    %215 = vmatpush1.msra.mxu0 %v173
    %216 = vmatprep.subr.mxu0 0.0
    %217 = vmatpush1.msra.mxu0 %v172
    %218 = vmatprep.subr.mxu0 0.0
    %219 = vmatpush1.msra.mxu0 %v171
    %220 = vmatprep.subr.mxu0 0.0
    %221 = vmatpush1.msra.mxu0 %v170
    %222 = vmatprep.subr.mxu0 0.0
    %223 = vmatpush1.msra.mxu0 %v169
    %224 = vmatprep.subr.mxu0 0.0
    %225 = vmatpush2.msra.mxu0 0.0
    %226 = vmatprep.subr.mxu0 0.0
    %227 = vmatpush2.msra.mxu0 0.0
    %228 = vmatprep.subr.mxu0 0.0
    %229 = vmatpush2.msra.mxu0 0.0
    %230 = vmatprep.subr.mxu0 0.0
    %231 = vmatpush2.msra.mxu0 0.0
    %232 = vmatprep.subr.mxu0 0.0
    %233 = vmatpush2.msra.mxu0 0.0
    %234 = vmatprep.subr.mxu0 0.0
    %235 = vmatpush2.msra.mxu0 0.0
    %236 = vmatprep.subr.mxu0 0.0
    %237 = vmatpush2.msra.mxu0 0.0
    %238 = vmatprep.subr.mxu0 0.0
    %239 = vmatpush2.msra.mxu0 0.0
    %240 = vmatprep.subr.mxu0 0.0
    %241 = vmatpush2.msra.mxu0 0.0
    %242 = vmatprep.subr.mxu0 0.0
    %243 = vmatpush2.msra.mxu0 0.0
    %244 = vmatprep.subr.mxu0 0.0
    %245 = vmatpush2.msra.mxu0 0.0
    %246 = vmatprep.subr.mxu0 0.0
    %247 = vmatpush2.msra.mxu0 0.0
    %248 = vmatprep.subr.mxu0 0.0
    %249 = vmatpush2.msra.mxu0 0.0
    %250 = vmatprep.subr.mxu0 0.0
    %251 = vmatpush2.msra.mxu0 0.0
    %252 = vmatprep.subr.mxu0 0.0
    %253 = vmatpush2.msra.mxu0 0.0
    %254 = vmatprep.subr.mxu0 0.0
    %255 = vmatpush2.msra.mxu0 0.0
    %256 = vmatprep.mubr.f32.mxu0 0.0
    %257 = vmatmul.mubr.f32.gmra.mxu0 %v168
    %v258 = vpop.f32.mrf.mxu0
    %v259 = vadd.f32 %v190, %v258
    %v260 = vpop.f32.mrf.mxu0
    %261 = vdwg.mxu0
    %262 = vst [vmem:[#allocation7] sm:$0x3] %v259
    // Predicated region
    $region34: #{odefunc_forward.1} parent=1 // pred_check
      _
    $region35: #{odefunc_forward.1} parent=1 // pred_check_branch
      %264 = sbr.rel (0) target = $region37
    $region36: #{odefunc_forward.1} parent=1 // pred_region
      %s266 = ssub.s32 32, 32
      %267 = vsyncadd [#allocation6], %s266
      %s269 = sshll.u32 [#allocation7], 4
      %s270 = int_to_ptr.vmem [resolvable:$true] %s269
      %272 = dma.vmem_to_hbm [thread:$0]  %s270, 32, %s8, [#allocation6]
    $region37: #{odefunc_forward.1} parent=1 // pred_fallthru
      _
    // Predicated region
    $region38: #{odefunc_forward.1} parent=1 // pred_check
      _
    $region39: #{odefunc_forward.1} parent=1 // pred_check_branch
      %274 = sbr.rel (0) target = $region41
    $region40: #{odefunc_forward.1} parent=1 // pred_region
      %275 = dma.done [#allocation6], 32
    $region41: #{odefunc_forward.1} parent=1 // pred_fallthru
      _
    %276 = vsyncpa [#allocation5], 1
    %277 = vsyncpa [#allocation6], 1

</llo_original>
